<compile_context>
chip_gen: v7x
topology: tpu7x:2x2x1
jax: 0.10.0
libtpu: 0.0.40
codegen_flags: <defaults>
</compile_context>

<pallas_src>
import jax
import jax.numpy as jnp
import numpy as np
from jax import lax
from jax.experimental import pallas as pl
from jax.experimental.pallas import tpu as pltpu


# --------------------- Kernel 1: hoisted input projection ---------------------
# xproj_f = x2d @ Wih_f + b_f ;  xproj_b = x2d @ Wih_b + b_b   (gate order ifog)
def input_proj_kernel(x_ref, wf_ref, wb_ref, bf_ref, bb_ref, of_ref, ob_ref):
    x = x_ref[...]
    of_ref[...] = (jnp.dot(x, wf_ref[...],
                           preferred_element_type=jnp.float32) + bf_ref[...])
    ob_ref[...] = (jnp.dot(x, wb_ref[...],
                           preferred_element_type=jnp.float32) + bb_ref[...])


# ----------- Kernel 2: sequential recurrence + fused embedding ----------------
# Single grid point; time loop inside the kernel. Per step:
#   gates_d = xproj_d[t_d] + h_d @ Whh_d      (one (B,H)x(H,4H) matmul / dir)
#   out[t_d] += h_d_new @ Wemb_d              (rides in MXU slack)
# Gate columns are pre-packed host-side to [i, f, o, g].
def lstm_recurrence_kernel(xpf_ref, xpb_ref, whh_f_ref, whh_b_ref,
                           wef_ref, web_ref, bemb_ref, o_ref,
                           hf, cf, hb, cb):
    T = xpf_ref.shape[0]
    H = whh_f_ref.shape[0]

    hf[...] = jnp.zeros_like(hf)
    cf[...] = jnp.zeros_like(cf)
    hb[...] = jnp.zeros_like(hb)
    cb[...] = jnp.zeros_like(cb)

    # VMEM-resident output accumulator, initialized with the embedding bias.
    o_ref[...] = jnp.broadcast_to(bemb_ref[...], o_ref.shape)

    def gate_math(gates, c):
        # columns are [i | f | o | g]: one wide sigmoid slab + one tanh slab.
        sg = jax.nn.sigmoid(gates[:, :3 * H])
        g = jnp.tanh(gates[:, 3 * H:])
        i_g = sg[:, 0 * H:1 * H]
        f_g = sg[:, 1 * H:2 * H]
        o_g = sg[:, 2 * H:3 * H]
        c_new = f_g * c + i_g * g
        h_new = o_g * jnp.tanh(c_new)
        return h_new, c_new

    def step(t, carry):
        tb = T - 1 - t
        # Issue both directions' recurrent matmuls before any gate math so the
        # two independent chains overlap MXU with EUP/VPU.
        gates_f = xpf_ref[t] + jnp.dot(hf[...], whh_f_ref[...],
                                       preferred_element_type=jnp.float32)
        gates_b = xpb_ref[tb] + jnp.dot(hb[...], whh_b_ref[...],
                                        preferred_element_type=jnp.float32)
        h_f, c_f = gate_math(gates_f, cf[...])
        h_b, c_b = gate_math(gates_b, cb[...])
        hf[...] = h_f
        cf[...] = c_f
        hb[...] = h_b
        cb[...] = c_b
        # Fused embedding accumulation (bias already in the accumulator).
        o_ref[t] = o_ref[t] + jnp.dot(h_f, wef_ref[...],
                                      preferred_element_type=jnp.float32)
        o_ref[tb] = o_ref[tb] + jnp.dot(h_b, web_ref[...],
                                        preferred_element_type=jnp.float32)
        return carry

    lax.fori_loop(0, T, step, 0, unroll=4)


# ------------------------------- Wrapper --------------------------------------


def lstm_decoder_forward(x, params, *, row_tile=512):
    """x: (T, B, I) float32 -> (T, B, num_classes) float32."""
    T, B, I = x.shape
    H = params["whh_f_k"].shape[0]
    C = params["w_emb_f"].shape[1]

    # Lane/sublane padding: batch to a multiple of 8, classes to 128-multiple.
    Bp = ((B + 7) // 8) * 8
    Cp = ((C + 127) // 128) * 128
    if Bp != B:
        x = jnp.pad(x, ((0, 0), (0, Bp - B), (0, 0)))

    wef = params["w_emb_f"]
    web = params["w_emb_b"]
    bemb = params["b_emb"]
    if Cp != C:
        wef = jnp.pad(wef, ((0, 0), (0, Cp - C)))
        web = jnp.pad(web, ((0, 0), (0, Cp - C)))
        bemb = jnp.pad(bemb, ((0, 0), (0, Cp - C)))

    rows = T * Bp
    rt = rows if rows <= row_tile else row_tile
    grid_rows = pl.cdiv(rows, rt)
    x2d = x.reshape(rows, I)

    inv = pl.Buffered(1)   # single-buffer grid-invariant / resident blocks

    # Stage 1: streaming x-side matmuls for both directions (biases folded in).
    xpf2d, xpb2d = pl.pallas_call(
        input_proj_kernel,
        out_shape=(jax.ShapeDtypeStruct((rows, 4 * H), jnp.float32),
                   jax.ShapeDtypeStruct((rows, 4 * H), jnp.float32)),
        grid_spec=pltpu.PrefetchScalarGridSpec(
            num_scalar_prefetch=0,
            grid=(grid_rows,),
            in_specs=[
                pl.BlockSpec((rt, I), lambda r: (r, 0)),
                pl.BlockSpec((I, 4 * H), lambda r: (0, 0), pipeline_mode=inv),
                pl.BlockSpec((I, 4 * H), lambda r: (0, 0), pipeline_mode=inv),
                pl.BlockSpec((1, 4 * H), lambda r: (0, 0), pipeline_mode=inv),
                pl.BlockSpec((1, 4 * H), lambda r: (0, 0), pipeline_mode=inv),
            ],
            out_specs=[pl.BlockSpec((rt, 4 * H), lambda r: (r, 0)),
                       pl.BlockSpec((rt, 4 * H), lambda r: (r, 0))],
        ),
        compiler_params=pltpu.CompilerParams(
            dimension_semantics=("parallel",)),
    )(x2d, params["wih_f_k"], params["wih_b_k"],
      params["b_f_k"], params["b_b_k"])

    xpf = xpf2d.reshape(T, Bp, 4 * H)
    xpb = xpb2d.reshape(T, Bp, 4 * H)

    # Explicit VMEM budget for stage 2 (only raise above the default if needed).
    needed = 4 * (2 * T * Bp * 4 * H      # xproj_f / xproj_b (single-buffered)
                  + 2 * H * 4 * H         # whh_f / whh_b
                  + 2 * H * Cp + Cp       # embedding weights + bias
                  + 2 * T * Bp * Cp       # output accumulator (double-buffered)
                  + 4 * Bp * H)           # h/c scratch
    vmem_limit = (None if 2 * needed <= 32 * 1024 * 1024
                  else min(2 * needed, 56 * 1024 * 1024))

    # Stage 2: recurrence + fused embedding, fully resident, single program.
    out3d = pl.pallas_call(
        lstm_recurrence_kernel,
        out_shape=jax.ShapeDtypeStruct((T, Bp, Cp), jnp.float32),
        grid_spec=pltpu.PrefetchScalarGridSpec(
            num_scalar_prefetch=0,
            grid=(1,),
            in_specs=[
                pl.BlockSpec((T, Bp, 4 * H), lambda i: (0, 0, 0),
                             pipeline_mode=inv),
                pl.BlockSpec((T, Bp, 4 * H), lambda i: (0, 0, 0),
                             pipeline_mode=inv),
                pl.BlockSpec((H, 4 * H), lambda i: (0, 0), pipeline_mode=inv),
                pl.BlockSpec((H, 4 * H), lambda i: (0, 0), pipeline_mode=inv),
                pl.BlockSpec((H, Cp), lambda i: (0, 0), pipeline_mode=inv),
                pl.BlockSpec((H, Cp), lambda i: (0, 0), pipeline_mode=inv),
                pl.BlockSpec((1, Cp), lambda i: (0, 0), pipeline_mode=inv),
            ],
            out_specs=pl.BlockSpec((T, Bp, Cp), lambda i: (0, 0, 0)),
            scratch_shapes=[pltpu.VMEM((Bp, H), jnp.float32)] * 4,
        ),
        compiler_params=pltpu.CompilerParams(
            dimension_semantics=("arbitrary",),
            vmem_limit_bytes=vmem_limit),
    )(xpf, xpb, params["whh_f_k"], params["whh_b_k"], wef, web, bemb)

    return out3d[:, :B, :C]


# --------------------------- Pure-JAX reference --------------------------------


def _lstm_ref_dir(x, wih, whh, b):
    B = x.shape[1]
    H = whh.shape[0]

    def step(carry, xt):
        h, c = carry
        gates = xt @ wih + h @ whh + b          # PyTorch gate order [i,f,g,o]
        i = jax.nn.sigmoid(gates[:, 0 * H:1 * H])
        f = jax.nn.sigmoid(gates[:, 1 * H:2 * H])
        g = jnp.tanh(gates[:, 2 * H:3 * H])
        o = jax.nn.sigmoid(gates[:, 3 * H:4 * H])
        c = f * c + i * g
        h = o * jnp.tanh(c)
        return (h, c), h

    init = (jnp.zeros((B, H), jnp.float32), jnp.zeros((B, H), jnp.float32))
    _, hs = jax.lax.scan(step, init, x)
    return hs


def lstm_decoder_ref(x, params):
    T, B, _ = x.shape
    C = params["w_emb_f"].shape[1]
    hf = _lstm_ref_dir(x, params["wih_f"], params["whh_f"], params["b_f"])
    hb = _lstm_ref_dir(x[::-1], params["wih_b"], params["whh_b"],
                       params["b_b"])[::-1]
    H = hf.shape[-1]
    out = (hf.reshape(T * B, H) @ params["w_emb_f"]
           + hb.reshape(T * B, H) @ params["w_emb_b"]
           + params["b_emb"])
    return out.reshape(T, B, C)


# ------------------------------- Param init -------------------------------------


def init_params(key, input_size, hidden_size, num_classes):
    """Deterministic synthetic params, PyTorch-style uniform(-k, k) init."""
    H, I, C = hidden_size, input_size, num_classes
    k_lstm = 1.0 / np.sqrt(H)
    k_emb = 1.0 / np.sqrt(2 * H)
    keys = jax.random.split(key, 10)

    def u(k, shape, bound):
        return jax.random.uniform(k, shape, jnp.float32, -bound, bound)

    def repack_ifog(w):
        # Gate columns [i|f|g|o] -> [i|f|o|g]: sigmoid gates become contiguous.
        return jnp.concatenate(
            [w[..., :2 * H], w[..., 3 * H:], w[..., 2 * H:3 * H]], axis=-1)

    def direction(k0, k1, k2, k3):
        # PyTorch layout: weight_ih (4H, I), weight_hh (4H, H), biases (4H,),
        # gate order [i, f, g, o] along the 4H axis.
        w_ih = u(k0, (4 * H, I), k_lstm)
        w_hh = u(k1, (4 * H, H), k_lstm)
        b_ih = u(k2, (4 * H,), k_lstm)
        b_hh = u(k3, (4 * H,), k_lstm)
        wih_t, whh_t, b = w_ih.T, w_hh.T, b_ih + b_hh
        ref = (wih_t, whh_t, b)                                   # [i,f,g,o]
        ker = (repack_ifog(wih_t), repack_ifog(whh_t),
               repack_ifog(b).reshape(1, 4 * H))                  # [i,f,o,g]
        return ref, ker

    (wih_f, whh_f, b_f), (wih_f_k, whh_f_k, b_f_k) = direction(*keys[0:4])
    (wih_b, whh_b, b_b), (wih_b_k, whh_b_k, b_b_k) = direction(*keys[4:8])

    # Linear(2H, C): torch weight (C, 2H) -> transposed (2H, C), split per dir.
    w_emb_t = u(keys[8], (C, 2 * H), k_emb).T                     # (2H, C)
    b_emb = u(keys[9], (C,), k_emb).reshape(1, C)

    return dict(
        # kernel layout (gate order [i,f,o,g])
        wih_f_k=wih_f_k, whh_f_k=whh_f_k, b_f_k=b_f_k,
        wih_b_k=wih_b_k, whh_b_k=whh_b_k, b_b_k=b_b_k,
        w_emb_f=w_emb_t[:H], w_emb_b=w_emb_t[H:], b_emb=b_emb,
        # reference layout (PyTorch gate order [i,f,g,o])
        wih_f=wih_f, whh_f=whh_f, b_f=b_f,
        wih_b=wih_b, whh_b=whh_b, b_b=b_b,
    )


# ---------------------------------- Main ----------------------------------------

if __name__ == "__main__":
    T, B, I, H, C = 8, 2, 32, 32, 16   # seq, batch, input_size, hidden, classes

    key = jax.random.PRNGKey(0)
    kx, kp = jax.random.split(key)
    x = jax.random.normal(kx, (T, B, I), jnp.float32)
    params = init_params(kp, I, H, C)

    out = jax.block_until_ready(lstm_decoder_forward(x, params))
    ref = jax.block_until_ready(lstm_decoder_ref(x, params))

    assert out.shape == (T, B, C), out.shape
    np.testing.assert_allclose(np.asarray(out), np.asarray(ref),
                               rtol=1e-4, atol=1e-4)
    print("KERNEL_OK")
</pallas_src>

<mosaic_0001>
module attributes {stable_mosaic.version = 11 : i64} {
  func.func @input_proj_kernel(%arg0: i32, %arg1: memref<64x32xf32, #tpu.memory_space<vmem>>, %arg2: memref<32x128xf32, #tpu.memory_space<vmem>>, %arg3: memref<32x128xf32, #tpu.memory_space<vmem>>, %arg4: memref<1x128xf32, #tpu.memory_space<vmem>>, %arg5: memref<1x128xf32, #tpu.memory_space<vmem>>, %arg6: memref<64x128xf32, #tpu.memory_space<vmem>>, %arg7: memref<64x128xf32, #tpu.memory_space<vmem>>) attributes {dimension_semantics = [#tpu.dimension_semantics<parallel>], iteration_bounds = array<i64: 1>, scalar_prefetch = 0 : i64, scratch_operands = 0 : i64, tpu.core_type = #tpu.core_type<tc>, window_params = [{transform_indices = @transform_0, window_bounds = array<i64: 64, 32>}, {pipeline_mode = #tpu.pipeline_mode<synchronous>, transform_indices = @transform_1, window_bounds = array<i64: 32, 128>}, {pipeline_mode = #tpu.pipeline_mode<synchronous>, transform_indices = @transform_2, window_bounds = array<i64: 32, 128>}, {pipeline_mode = #tpu.pipeline_mode<synchronous>, transform_indices = @transform_3, window_bounds = array<i64: 1, 128>}, {pipeline_mode = #tpu.pipeline_mode<synchronous>, transform_indices = @transform_4, window_bounds = array<i64: 1, 128>}, {transform_indices = @transform_5, window_bounds = array<i64: 64, 128>}, {transform_indices = @transform_6, window_bounds = array<i64: 64, 128>}]} {
    %c0 = arith.constant 0 : index
    %c0_0 = arith.constant 0 : index
    %0 = vector.load %arg1[%c0, %c0_0] : memref<64x32xf32, #tpu.memory_space<vmem>>, vector<64x32xf32>
    %c0_1 = arith.constant 0 : index
    %c0_2 = arith.constant 0 : index
    %1 = vector.load %arg2[%c0_1, %c0_2] : memref<32x128xf32, #tpu.memory_space<vmem>>, vector<32x128xf32>
    %cst = arith.constant dense<0.000000e+00> : vector<64x128xf32>
    %2 = tpu.matmul %0, %1, %cst {dimension_numbers = #tpu.dot_dimension_numbers<[1], [0], [0], [1], [0, 0, 1, 1], [], []>} : vector<64x32xf32>, vector<32x128xf32>, vector<64x128xf32> -> vector<64x128xf32>
    %c0_3 = arith.constant 0 : index
    %c0_4 = arith.constant 0 : index
    %3 = vector.load %arg4[%c0_3, %c0_4] : memref<1x128xf32, #tpu.memory_space<vmem>>, vector<1x128xf32>
    %4 = vector.broadcast %3 : vector<1x128xf32> to vector<64x128xf32>
    %5 = arith.addf %2, %4 : vector<64x128xf32>
    %c0_5 = arith.constant 0 : index
    %c0_6 = arith.constant 0 : index
    %6 = vector.load %arg6[%c0_5, %c0_6] : memref<64x128xf32, #tpu.memory_space<vmem>>, vector<64x128xf32>
    tpu.vector_store %arg6[%c0_5, %c0_6], %5 {strides = array<i32>} : memref<64x128xf32, #tpu.memory_space<vmem>>, vector<64x128xf32>,
    %c0_7 = arith.constant 0 : index
    %c0_8 = arith.constant 0 : index
    %7 = vector.load %arg3[%c0_7, %c0_8] : memref<32x128xf32, #tpu.memory_space<vmem>>, vector<32x128xf32>
    %cst_9 = arith.constant dense<0.000000e+00> : vector<64x128xf32>
    %8 = tpu.matmul %0, %7, %cst_9 {dimension_numbers = #tpu.dot_dimension_numbers<[1], [0], [0], [1], [0, 0, 1, 1], [], []>} : vector<64x32xf32>, vector<32x128xf32>, vector<64x128xf32> -> vector<64x128xf32>
    %c0_10 = arith.constant 0 : index
    %c0_11 = arith.constant 0 : index
    %9 = vector.load %arg5[%c0_10, %c0_11] : memref<1x128xf32, #tpu.memory_space<vmem>>, vector<1x128xf32>
    %10 = vector.broadcast %9 : vector<1x128xf32> to vector<64x128xf32>
    %11 = arith.addf %8, %10 : vector<64x128xf32>
    %c0_12 = arith.constant 0 : index
    %c0_13 = arith.constant 0 : index
    %12 = vector.load %arg7[%c0_12, %c0_13] : memref<64x128xf32, #tpu.memory_space<vmem>>, vector<64x128xf32>
    tpu.vector_store %arg7[%c0_12, %c0_13], %11 {strides = array<i32>} : memref<64x128xf32, #tpu.memory_space<vmem>>, vector<64x128xf32>,
    return
  }
  func.func @transform_0(%arg0: i32) -> (i32, i32) {
    %c0_i32 = arith.constant 0 : i32
    %c0_i32_0 = arith.constant 0 : i32
    return %arg0, %c0_i32 : i32, i32
  }
  func.func @transform_1(%arg0: i32) -> (i32, i32) {
    %c0_i32 = arith.constant 0 : i32
    %c0_i32_0 = arith.constant 0 : i32
    %c0_i32_1 = arith.constant 0 : i32
    return %c0_i32, %c0_i32_0 : i32, i32
  }
  func.func @transform_2(%arg0: i32) -> (i32, i32) {
    %c0_i32 = arith.constant 0 : i32
    %c0_i32_0 = arith.constant 0 : i32
    %c0_i32_1 = arith.constant 0 : i32
    return %c0_i32, %c0_i32_0 : i32, i32
  }
  func.func @transform_3(%arg0: i32) -> (i32, i32) {
    %c0_i32 = arith.constant 0 : i32
    %c0_i32_0 = arith.constant 0 : i32
    %c0_i32_1 = arith.constant 0 : i32
    return %c0_i32, %c0_i32_0 : i32, i32
  }
  func.func @transform_4(%arg0: i32) -> (i32, i32) {
    %c0_i32 = arith.constant 0 : i32
    %c0_i32_0 = arith.constant 0 : i32
    %c0_i32_1 = arith.constant 0 : i32
    return %c0_i32, %c0_i32_0 : i32, i32
  }
  func.func @transform_5(%arg0: i32) -> (i32, i32) {
    %c0_i32 = arith.constant 0 : i32
    %c0_i32_0 = arith.constant 0 : i32
    return %arg0, %c0_i32 : i32, i32
  }
  func.func @transform_6(%arg0: i32) -> (i32, i32) {
    %c0_i32 = arith.constant 0 : i32
    %c0_i32_0 = arith.constant 0 : i32
    return %arg0, %c0_i32 : i32, i32
  }
}

</mosaic_0001>

<llo_original>
// kernel: tpu_custom_call.1
$region0: #{tpu_custom_call.1}
  #allocation0 [shape = 'u32[]', space=smem, size = 0x4, offset = 0x4, fixed_abs, tag = 'smem constant byte address 0x4 - core index']
  #allocation1 [shape = 'u32[144,128]{1,0:T(1,128)}', space=vmem, size = 0x12000, scoped, tag = 'internal scratch']
  %s0 = inlined_call_operand.vmem [shape: f32[64,32], index: 0, kind: input, shape index: {}]
  %s1 = inlined_call_operand.vmem [shape: f32[32,128], index: 1, kind: input, shape index: {}]
  %s2 = inlined_call_operand.vmem [shape: f32[32,128], index: 2, kind: input, shape index: {}]
  %s3 = inlined_call_operand.vmem [shape: f32[1,128], index: 3, kind: input, shape index: {}]
  %s4 = inlined_call_operand.vmem [shape: f32[1,128], index: 4, kind: input, shape index: {}]
  %s5 = inlined_call_operand.hbm [shape: f32[64,128], index: 5, kind: output, shape index: {0}]
  %s6 = inlined_call_operand.hbm [shape: f32[64,128], index: 6, kind: output, shape index: {1}]
  %7 = xla_tuple %s5, %s6
  %s8 = sld [smem:[#allocation0]]
  $region38: #{tpu_custom_call.1} parent=0
    _
  %s10 = ssub.s32 1, %s8
  %s11 = scalar_select 0, %s10, %s8
  $region1: #{tpu_custom_call.1} parent=0
    #allocation2 [shape = 'u8[32768]{0}', space=vmem, size = 0x8000, scoped, tag = 'output window, operand 0, single buffered']
    #allocation3 [shape = 's32[1]{0}', space=sflag, size = 0x4, scoped, tag = 'scoped memory for tpu_custom_call.1']
    #allocation4 [shape = 'u8[32768]{0}', space=vmem, size = 0x8000, scoped, tag = 'output window, operand 1, single buffered']
    #allocation5 [shape = 's32[1]{0}', space=sflag, size = 0x4, scoped, tag = 'scoped memory for tpu_custom_call.1']
    %12 = vsyncpa [#allocation3], 0
    %13 = vsyncpa [#allocation5], 0
    // Predicated region
    $region2: #{tpu_custom_call.1} parent=1 // pred_check
      _
    $region3: #{tpu_custom_call.1} parent=1 // pred_check_branch
      %15 = sbr.rel (0) target = $region5
    $region4: #{tpu_custom_call.1} parent=1 // pred_region
      _
    $region5: #{tpu_custom_call.1} parent=1 // pred_fallthru
      _
    // Predicated region
    $region6: #{tpu_custom_call.1} parent=1 // pred_check
      _
    $region7: #{tpu_custom_call.1} parent=1 // pred_check_branch
      %17 = sbr.rel (0) target = $region9
    $region8: #{tpu_custom_call.1} parent=1 // pred_region
      _
    $region9: #{tpu_custom_call.1} parent=1 // pred_fallthru
      _
    // Predicated region
    $region10: #{tpu_custom_call.1} parent=1 // pred_check
      _
    $region11: #{tpu_custom_call.1} parent=1 // pred_check_branch
      %19 = sbr.rel (0) target = $region13
    $region12: #{tpu_custom_call.1} parent=1 // pred_region
      _
    $region13: #{tpu_custom_call.1} parent=1 // pred_fallthru
      _
    // Predicated region
    $region14: #{tpu_custom_call.1} parent=1 // pred_check
      _
    $region15: #{tpu_custom_call.1} parent=1 // pred_check_branch
      %21 = sbr.rel (0) target = $region17
    $region16: #{tpu_custom_call.1} parent=1 // pred_region
      _
    $region17: #{tpu_custom_call.1} parent=1 // pred_fallthru
      _
    // Predicated region
    $region18: #{tpu_custom_call.1} parent=1 // pred_check
      _
    $region19: #{tpu_custom_call.1} parent=1 // pred_check_branch
      %23 = sbr.rel (0) target = $region21
    $region20: #{tpu_custom_call.1} parent=1 // pred_region
      _
    $region21: #{tpu_custom_call.1} parent=1 // pred_fallthru
      _
    %v24 = vld [vmem:[%s0] sm:$0xff]
    %v25 = vld [vmem:[%s0 + $0x8] sm:$0xff]
    %v26 = vld [vmem:[%s0 + $0x10] sm:$0xff]
    %v27 = vld [vmem:[%s0 + $0x18] sm:$0xff]
    %v28 = vld [vmem:[%s0 + $0x20] sm:$0xff]
    %v29 = vld [vmem:[%s0 + $0x28] sm:$0xff]
    %v30 = vld [vmem:[%s0 + $0x30] sm:$0xff]
    %v31 = vld [vmem:[%s0 + $0x38] sm:$0xff]
    %v32 = vld [vmem:[%s1] sm:$0xff]
    %v33 = vld [vmem:[%s1 + $0x8] sm:$0xff]
    %v34 = vld [vmem:[%s1 + $0x10] sm:$0xff]
    %v35 = vld [vmem:[%s1 + $0x18] sm:$0xff]
    %v36 = vld [vmem:[%s3] sm:$0x1]
    %v38 = vlaneseq
    %v39 = vshrl.u32 %v38, 7
    %v40 = vsub.s32 0, %v39
    %v41 = vrot.slane %v36, %v40
    %vm43 = vcmask 261120
    %v45 = vsel %vm43, %v24, 0
    %v48 = vsel %vm43, %v25, 0
    %v51 = vsel %vm43, %v26, 0
    %v54 = vsel %vm43, %v27, 0
    %v57 = vsel %vm43, %v28, 0
    %v60 = vsel %vm43, %v29, 0
    %v63 = vsel %vm43, %v30, 0
    %v66 = vsel %vm43, %v31, 0
    %68 = vmatprep.subr.mxu0 0.0
    %69 = vmatpush1.msra.mxu0 %v32
    %70 = vmatprep.subr.mxu0 0.0
    %71 = vmatpush1.msra.mxu0 %v33
    %72 = vmatprep.subr.mxu0 0.0
    %73 = vmatpush1.msra.mxu0 %v34
    %74 = vmatprep.subr.mxu0 0.0
    %75 = vmatpush1.msra.mxu0 %v35
    %76 = vmatprep.subr.mxu0 0.0
    %77 = vmatpush1.msra.mxu0 0.0
    %78 = vmatprep.subr.mxu0 0.0
    %79 = vmatpush1.msra.mxu0 0.0
    %80 = vmatprep.subr.mxu0 0.0
    %81 = vmatpush1.msra.mxu0 0.0
    %82 = vmatprep.subr.mxu0 0.0
    %83 = vmatpush1.msra.mxu0 0.0
    %84 = vmatprep.subr.mxu0 0.0
    %85 = vmatpush1.msra.mxu0 0.0
    %86 = vmatprep.subr.mxu0 0.0
    %87 = vmatpush1.msra.mxu0 0.0
    %88 = vmatprep.subr.mxu0 0.0
    %89 = vmatpush1.msra.mxu0 0.0
    %90 = vmatprep.subr.mxu0 0.0
    %91 = vmatpush1.msra.mxu0 0.0
    %92 = vmatprep.subr.mxu0 0.0
    %93 = vmatpush1.msra.mxu0 0.0
    %94 = vmatprep.subr.mxu0 0.0
    %95 = vmatpush1.msra.mxu0 0.0
    %96 = vmatprep.subr.mxu0 0.0
    %97 = vmatpush1.msra.mxu0 0.0
    %98 = vmatprep.subr.mxu0 0.0
    %99 = vmatpush1.msra.mxu0 0.0
    %100 = vmatprep.subr.mxu0 0.0
    %101 = vmatpush1.msra.mxu0 0.0
    %102 = vmatprep.subr.mxu0 0.0
    %103 = vmatpush1.msra.mxu0 0.0
    %104 = vmatprep.subr.mxu0 0.0
    %105 = vmatpush1.msra.mxu0 0.0
    %106 = vmatprep.subr.mxu0 0.0
    %107 = vmatpush1.msra.mxu0 0.0
    %108 = vmatprep.subr.mxu0 0.0
    %109 = vmatpush1.msra.mxu0 0.0
    %110 = vmatprep.subr.mxu0 0.0
    %111 = vmatpush1.msra.mxu0 0.0
    %112 = vmatprep.subr.mxu0 0.0
    %113 = vmatpush1.msra.mxu0 0.0
    %114 = vmatprep.subr.mxu0 0.0
    %115 = vmatpush1.msra.mxu0 0.0
    %116 = vmatprep.subr.mxu0 0.0
    %117 = vmatpush1.msra.mxu0 0.0
    %118 = vmatprep.subr.mxu0 0.0
    %119 = vmatpush1.msra.mxu0 0.0
    %120 = vmatprep.subr.mxu0 0.0
    %121 = vmatpush1.msra.mxu0 0.0
    %122 = vmatprep.subr.mxu0 0.0
    %123 = vmatpush1.msra.mxu0 0.0
    %124 = vmatprep.subr.mxu0 0.0
    %125 = vmatpush1.msra.mxu0 0.0
    %126 = vmatprep.subr.mxu0 0.0
    %127 = vmatpush1.msra.mxu0 0.0
    %128 = vmatprep.subr.mxu0 0.0
    %129 = vmatpush1.msra.mxu0 0.0
    %130 = vmatprep.subr.mxu0 0.0
    %131 = vmatpush1.msra.mxu0 0.0
    %132 = vmatprep.mubr.f32.mxu0 0.0
    %133 = vmatmul.mubr.f32.gmra.mrb[0].mxu0 %v45
    %v134 = vpop.f32.mrb[0].mxu0
    %v135 = vadd.f32 %v41, %v134
    %v136 = vpop.f32.mrb[0].mxu0
    %137 = vmatprep.mubr.f32.mxu0 0.0
    %138 = vmatmul.mubr.f32.gmra.mrb[0].mxu0 %v48
    %v139 = vpop.f32.mrb[0].mxu0
    %v140 = vadd.f32 %v41, %v139
    %v141 = vpop.f32.mrb[0].mxu0
    %142 = vmatprep.mubr.f32.mxu0 0.0
    %143 = vmatmul.mubr.f32.gmra.mrb[0].mxu0 %v51
    %v144 = vpop.f32.mrb[0].mxu0
    %v145 = vadd.f32 %v41, %v144
    %v146 = vpop.f32.mrb[0].mxu0
    %147 = vmatprep.mubr.f32.mxu0 0.0
    %148 = vmatmul.mubr.f32.gmra.mrb[0].mxu0 %v54
    %v149 = vpop.f32.mrb[0].mxu0
    %v150 = vadd.f32 %v41, %v149
    %v151 = vpop.f32.mrb[0].mxu0
    %152 = vmatprep.mubr.f32.mxu0 0.0
    %153 = vmatmul.mubr.f32.gmra.mrb[0].mxu0 %v57
    %v154 = vpop.f32.mrb[0].mxu0
    %v155 = vadd.f32 %v41, %v154
    %v156 = vpop.f32.mrb[0].mxu0
    %157 = vmatprep.mubr.f32.mxu0 0.0
    %158 = vmatmul.mubr.f32.gmra.mrb[0].mxu0 %v60
    %v159 = vpop.f32.mrb[0].mxu0
    %v160 = vadd.f32 %v41, %v159
    %v161 = vpop.f32.mrb[0].mxu0
    %162 = vmatprep.mubr.f32.mxu0 0.0
    %163 = vmatmul.mubr.f32.gmra.mrb[0].mxu0 %v63
    %v164 = vpop.f32.mrb[0].mxu0
    %v165 = vadd.f32 %v41, %v164
    %v166 = vpop.f32.mrb[0].mxu0
    %167 = vmatprep.mubr.f32.mxu0 0.0
    %168 = vmatmul.mubr.f32.gmra.mrb[0].mxu0 %v66
    %v169 = vpop.f32.mrb[0].mxu0
    %v170 = vadd.f32 %v41, %v169
    %v171 = vpop.f32.mrb[0].mxu0
    %172 = vdwg.mxu0
    %173 = vst [vmem:[#allocation2] sm:$0xff] %v135
    %174 = vst [vmem:[#allocation2 + $0x8] sm:$0xff] %v140
    %175 = vst [vmem:[#allocation2 + $0x10] sm:$0xff] %v145
    %176 = vst [vmem:[#allocation2 + $0x18] sm:$0xff] %v150
    %177 = vst [vmem:[#allocation2 + $0x20] sm:$0xff] %v155
    %178 = vst [vmem:[#allocation2 + $0x28] sm:$0xff] %v160
    %179 = vst [vmem:[#allocation2 + $0x30] sm:$0xff] %v165
    %180 = vst [vmem:[#allocation2 + $0x38] sm:$0xff] %v170
    %v181 = vld [vmem:[%s2] sm:$0xff]
    %v182 = vld [vmem:[%s2 + $0x8] sm:$0xff]
    %v183 = vld [vmem:[%s2 + $0x10] sm:$0xff]
    %v184 = vld [vmem:[%s2 + $0x18] sm:$0xff]
    %v185 = vld [vmem:[%s4] sm:$0x1]
    %v187 = vlaneseq
    %v188 = vshrl.u32 %v187, 7
    %v189 = vsub.s32 0, %v188
    %v190 = vrot.slane %v185, %v189
    %192 = vmatprep.subr.mxu0 0.0
    %193 = vmatpush1.msra.mxu0 %v181
    %194 = vmatprep.subr.mxu0 0.0
    %195 = vmatpush1.msra.mxu0 %v182
    %196 = vmatprep.subr.mxu0 0.0
    %197 = vmatpush1.msra.mxu0 %v183
    %198 = vmatprep.subr.mxu0 0.0
    %199 = vmatpush1.msra.mxu0 %v184
    %200 = vmatprep.subr.mxu0 0.0
    %201 = vmatpush1.msra.mxu0 0.0
    %202 = vmatprep.subr.mxu0 0.0
    %203 = vmatpush1.msra.mxu0 0.0
    %204 = vmatprep.subr.mxu0 0.0
    %205 = vmatpush1.msra.mxu0 0.0
    %206 = vmatprep.subr.mxu0 0.0
    %207 = vmatpush1.msra.mxu0 0.0
    %208 = vmatprep.subr.mxu0 0.0
    %209 = vmatpush1.msra.mxu0 0.0
    %210 = vmatprep.subr.mxu0 0.0
    %211 = vmatpush1.msra.mxu0 0.0
    %212 = vmatprep.subr.mxu0 0.0
    %213 = vmatpush1.msra.mxu0 0.0
    %214 = vmatprep.subr.mxu0 0.0
    %215 = vmatpush1.msra.mxu0 0.0
    %216 = vmatprep.subr.mxu0 0.0
    %217 = vmatpush1.msra.mxu0 0.0
    %218 = vmatprep.subr.mxu0 0.0
    %219 = vmatpush1.msra.mxu0 0.0
    %220 = vmatprep.subr.mxu0 0.0
    %221 = vmatpush1.msra.mxu0 0.0
    %222 = vmatprep.subr.mxu0 0.0
    %223 = vmatpush1.msra.mxu0 0.0
    %224 = vmatprep.subr.mxu0 0.0
    %225 = vmatpush1.msra.mxu0 0.0
    %226 = vmatprep.subr.mxu0 0.0
    %227 = vmatpush1.msra.mxu0 0.0
    %228 = vmatprep.subr.mxu0 0.0
    %229 = vmatpush1.msra.mxu0 0.0
    %230 = vmatprep.subr.mxu0 0.0
    %231 = vmatpush1.msra.mxu0 0.0
    %232 = vmatprep.subr.mxu0 0.0
    %233 = vmatpush1.msra.mxu0 0.0
    %234 = vmatprep.subr.mxu0 0.0
    %235 = vmatpush1.msra.mxu0 0.0
    %236 = vmatprep.subr.mxu0 0.0
    %237 = vmatpush1.msra.mxu0 0.0
    %238 = vmatprep.subr.mxu0 0.0
    %239 = vmatpush1.msra.mxu0 0.0
    %240 = vmatprep.subr.mxu0 0.0
    %241 = vmatpush1.msra.mxu0 0.0
    %242 = vmatprep.subr.mxu0 0.0
    %243 = vmatpush1.msra.mxu0 0.0
    %244 = vmatprep.subr.mxu0 0.0
    %245 = vmatpush1.msra.mxu0 0.0
    %246 = vmatprep.subr.mxu0 0.0
    %247 = vmatpush1.msra.mxu0 0.0
    %248 = vmatprep.subr.mxu0 0.0
    %249 = vmatpush1.msra.mxu0 0.0
    %250 = vmatprep.subr.mxu0 0.0
    %251 = vmatpush1.msra.mxu0 0.0
    %252 = vmatprep.subr.mxu0 0.0
    %253 = vmatpush1.msra.mxu0 0.0
    %254 = vmatprep.subr.mxu0 0.0
    %255 = vmatpush1.msra.mxu0 0.0
    %256 = vmatprep.mubr.f32.mxu0 0.0
    %257 = vmatmul.mubr.f32.gmra.mrb[0].mxu0 %v45
    %v258 = vpop.f32.mrb[0].mxu0
    %v259 = vadd.f32 %v190, %v258
    %v260 = vpop.f32.mrb[0].mxu0
    %261 = vmatprep.mubr.f32.mxu0 0.0
    %262 = vmatmul.mubr.f32.gmra.mrb[0].mxu0 %v48
    %v263 = vpop.f32.mrb[0].mxu0
    %v264 = vadd.f32 %v190, %v263
    %v265 = vpop.f32.mrb[0].mxu0
    %266 = vmatprep.mubr.f32.mxu0 0.0
    %267 = vmatmul.mubr.f32.gmra.mrb[0].mxu0 %v51
    %v268 = vpop.f32.mrb[0].mxu0
    %v269 = vadd.f32 %v190, %v268
    %v270 = vpop.f32.mrb[0].mxu0
    %271 = vmatprep.mubr.f32.mxu0 0.0
    %272 = vmatmul.mubr.f32.gmra.mrb[0].mxu0 %v54
    %v273 = vpop.f32.mrb[0].mxu0
    %v274 = vadd.f32 %v190, %v273
    %v275 = vpop.f32.mrb[0].mxu0
    %276 = vmatprep.mubr.f32.mxu0 0.0
    %277 = vmatmul.mubr.f32.gmra.mrb[0].mxu0 %v57
    %v278 = vpop.f32.mrb[0].mxu0
    %v279 = vadd.f32 %v190, %v278
    %v280 = vpop.f32.mrb[0].mxu0
    %281 = vmatprep.mubr.f32.mxu0 0.0
    %282 = vmatmul.mubr.f32.gmra.mrb[0].mxu0 %v60
    %v283 = vpop.f32.mrb[0].mxu0
    %v284 = vadd.f32 %v190, %v283
    %v285 = vpop.f32.mrb[0].mxu0
    %286 = vmatprep.mubr.f32.mxu0 0.0
    %287 = vmatmul.mubr.f32.gmra.mrb[0].mxu0 %v63
    %v288 = vpop.f32.mrb[0].mxu0
    %v289 = vadd.f32 %v190, %v288
    %v290 = vpop.f32.mrb[0].mxu0
    %291 = vmatprep.mubr.f32.mxu0 0.0
    %292 = vmatmul.mubr.f32.gmra.mrb[0].mxu0 %v66
    %v293 = vpop.f32.mrb[0].mxu0
    %v294 = vadd.f32 %v190, %v293
    %v295 = vpop.f32.mrb[0].mxu0
    %296 = vdwg.mxu0
    %297 = vst [vmem:[#allocation4] sm:$0xff] %v259
    %298 = vst [vmem:[#allocation4 + $0x8] sm:$0xff] %v264
    %299 = vst [vmem:[#allocation4 + $0x10] sm:$0xff] %v269
    %300 = vst [vmem:[#allocation4 + $0x18] sm:$0xff] %v274
    %301 = vst [vmem:[#allocation4 + $0x20] sm:$0xff] %v279
    %302 = vst [vmem:[#allocation4 + $0x28] sm:$0xff] %v284
    %303 = vst [vmem:[#allocation4 + $0x30] sm:$0xff] %v289
    %304 = vst [vmem:[#allocation4 + $0x38] sm:$0xff] %v294
    // Predicated region
    $region22: #{tpu_custom_call.1} parent=1 // pred_check
      _
    $region23: #{tpu_custom_call.1} parent=1 // pred_check_branch
      %306 = sbr.rel (0) target = $region25
    $region24: #{tpu_custom_call.1} parent=1 // pred_region
      %s308 = ssub.s32 1024, 1024
      %309 = vsyncadd [#allocation3], %s308
      %s310 = sshll.u32 [#allocation2], 4
      %s311 = int_to_ptr.vmem [resolvable:$true] %s310
      %316 = dma.vmem_to_hbm [thread:$0]  %s311, 1024, %s5, [#allocation3], 128, 128, 8
    $region25: #{tpu_custom_call.1} parent=1 // pred_fallthru
      _
    // Predicated region
    $region26: #{tpu_custom_call.1} parent=1 // pred_check
      _
    $region27: #{tpu_custom_call.1} parent=1 // pred_check_branch
      %318 = sbr.rel (0) target = $region29
    $region28: #{tpu_custom_call.1} parent=1 // pred_region
      %s320 = ssub.s32 1024, 1024
      %321 = vsyncadd [#allocation5], %s320
      %s322 = sshll.u32 [#allocation4], 4
      %s323 = int_to_ptr.vmem [resolvable:$true] %s322
      %328 = dma.vmem_to_hbm [thread:$0]  %s323, 1024, %s6, [#allocation5], 128, 128, 8
    $region29: #{tpu_custom_call.1} parent=1 // pred_fallthru
      _
    // Predicated region
    $region30: #{tpu_custom_call.1} parent=1 // pred_check
      _
    $region31: #{tpu_custom_call.1} parent=1 // pred_check_branch
      %330 = sbr.rel (0) target = $region33
    $region32: #{tpu_custom_call.1} parent=1 // pred_region
      %331 = dma.done [#allocation3], 1024
    $region33: #{tpu_custom_call.1} parent=1 // pred_fallthru
      _
    // Predicated region
    $region34: #{tpu_custom_call.1} parent=1 // pred_check
      _
    $region35: #{tpu_custom_call.1} parent=1 // pred_check_branch
      %333 = sbr.rel (0) target = $region37
    $region36: #{tpu_custom_call.1} parent=1 // pred_region
      %334 = dma.done [#allocation5], 1024
    $region37: #{tpu_custom_call.1} parent=1 // pred_fallthru
      _
    %335 = vsyncpa [#allocation3], 1
    %336 = vsyncpa [#allocation5], 1

</llo_original>
